<compile_context>
chip_gen: v5e
topology: v5e:2x2
jax: 0.10.0
libtpu: 0.0.40
codegen_flags: <defaults>
</compile_context>

<pallas_src>
import functools

import jax
import jax.numpy as jnp
from jax.experimental import pallas as pl
from jax.experimental.pallas import tpu as pltpu

KH = KW = 3  # fixed 3x3 kernel


def _round_up(x, m):
    return (x + m - 1) // m * m


def _conv_t_kernel(x_ref, w_ref, b_ref, o_ref, pad_ref, *, H, W, HP, WP, C, NB):
    # x_ref:   (NB, C, H, W)  VMEM, native NCHW input block
    # w_ref:   (KH*KW*C,)     SMEM, correlation weights, index (kh*KW+kw)*C + c
    # b_ref:   (1,)           SMEM, bias
    # o_ref:   (NB, W, H)     VMEM, already (W, H)-transposed output block
    # pad_ref: (HP+2, WP)     VMEM scratch: one channel with a 1-row top halo.
    #                         Data lives at rows 1..H, cols 0..W-1; everything
    #                         else stays zero for every channel / image.
    pad_ref[...] = jnp.zeros_like(pad_ref)
    bias = b_ref[0]

    def chan_body(c, accs):
        a0, a1, a2 = accs
        # Lane-aligned interior store (sublane offset 1 only).
        pad_ref[1:H + 1, 0:W] = x_ref[n_idx[0], c, :, :]
        for kh in range(KH):                          # static 3-tap unroll
            band = pad_ref[kh:kh + HP, :]             # (HP, WP) lane-aligned load
            base = kh * KW * C + c
            a0 = a0 + w_ref[base] * band              # kw = 0
            a1 = a1 + w_ref[base + C] * band          # kw = 1
            a2 = a2 + w_ref[base + 2 * C] * band      # kw = 2
        return (a0, a1, a2)

    # Small mutable cell so chan_body (shared between the static and fori
    # paths) can see the current image index.
    n_idx = [0]

    def image_body(n, carry):
        n_idx[0] = n
        z = jnp.zeros((HP, WP), jnp.float32)
        if C <= 8:
            accs = (z, z, z)
            for c in range(C):                        # static unroll, small C
                accs = chan_body(c, accs)
            a0, a1, a2 = accs
        else:
            a0, a1, a2 = jax.lax.fori_loop(0, C, chan_body, (z, z, z))

        # Combine the three kw taps with lane rolls (XLU).  out[h, w] =
        # a0[h, w-1] + a1[h, w] + a2[h, w+1]; wrapped lanes of the +1 roll read
        # an all-zero column (cols >= W are never written), wrapped lanes of
        # the -1 roll land at w = WP-1 >= W and are cropped below.
        acc = pltpu.roll(a0, 1, axis=1) + a1 + pltpu.roll(a2, WP - 1, axis=1)

        acc_t = acc.T                                 # (WP, HP) fused transpose
        o_ref[n, :, :] = acc_t[:W, :H] + bias
        return carry

    jax.lax.fori_loop(0, NB, image_body, 0)


def output_projection_layer(images, weight_t, bias, *, batch_block=None):
    """images: (N, C, H, W) float32.
    weight_t: ConvTranspose2d weight, shape (C, 1, 3, 3).
    bias: shape (1,).
    Returns (N, W, H, 1), matching torch.transpose(conv_transpose2d(x), 3, 1)."""
    N, C, H, W = images.shape

    HP = _round_up(H, 8)            # sublane-aligned accumulator rows
    WP = _round_up(W + 1, 128)      # lane-aligned accumulator cols; >= W+1 so
                                    # roll-wrapped lanes are zero or cropped

    # --- VMEM-aware batch-block selection using *padded* tile bytes ---------
    in_bytes_img = C * _round_up(H, 8) * _round_up(W, 128) * 4      # input / image
    out_bytes_img = _round_up(W, 8) * _round_up(H, 128) * 4         # output / image
    scratch_bytes = _round_up(HP + 2, 8) * WP * 4

    budget = 10 * 1024 * 1024       # double-buffered block budget; fits v5e's
                                    # 16 MiB default scoped VMEM with headroom
    if batch_block is None:
        nb = max(1, budget // (2 * (in_bytes_img + out_bytes_img)))
        nb = min(nb, N, 8)          # hard cap: keep in-kernel batch loop short
        # Keep several grid steps: DMA/compute overlap on all gens, and a
        # shardable "parallel" axis for v7x's two TensorCores.
        target_steps = min(N, 4)
        nb = max(1, min(nb, N // target_steps))
        while N % nb:
            nb -= 1
        batch_block = nb
    NB = batch_block
    assert N % NB == 0, (N, NB)

    est_bytes = 2 * NB * (in_bytes_img + out_bytes_img) + scratch_bytes
    vmem_limit = int(min(14 * 1024 * 1024, max(est_bytes + (2 << 20), 8 << 20)))

    # ConvTranspose2d (stride=1, padding=1) == correlation with the spatially
    # flipped kernel over a 1-pixel zero-padded input.
    # w_corr[kh, kw, c] = weight_t[c, 0, KH-1-kh, KW-1-kw]   (9*C scalars)
    w_corr = jnp.transpose(weight_t[:, 0, ::-1, ::-1], (1, 2, 0)).astype(jnp.float32)
    w_flat = w_corr.reshape(KH * KW * C)
    b1 = bias.reshape(1).astype(jnp.float32)
    x = images.astype(jnp.float32)           # no-op for f32 inputs

    kernel = functools.partial(_conv_t_kernel, H=H, W=W, HP=HP, WP=WP, C=C, NB=NB)

    y = pl.pallas_call(
        kernel,
        out_shape=jax.ShapeDtypeStruct((N, W, H), jnp.float32),
        grid_spec=pltpu.PrefetchScalarGridSpec(
            num_scalar_prefetch=0,
            grid=(N // NB,),
            in_specs=[
                pl.BlockSpec((NB, C, H, W), lambda i: (i, 0, 0, 0)),
                pl.BlockSpec(memory_space=pltpu.MemorySpace.SMEM),   # weights
                pl.BlockSpec(memory_space=pltpu.MemorySpace.SMEM),   # bias
            ],
            out_specs=pl.BlockSpec((NB, W, H), lambda i: (i, 0, 0)),
            scratch_shapes=[pltpu.VMEM((HP + 2, WP), jnp.float32)],
        ),
        compiler_params=pltpu.CompilerParams(
            dimension_semantics=("parallel",),
            vmem_limit_bytes=vmem_limit,
        ),
    )(x, w_flat, b1)

    # (N, W, H) -> (N, W, H, 1): free metadata reshape, no HBM pass.
    return y[..., None]


def _reference(images_nchw, weight_t, bias):
    """Direct scatter-add definition of ConvTranspose2d (stride=1, padding=1),
    followed by transpose(3, 1). Pure jnp, used only to validate the kernel."""
    N, C, H, W = images_nchw.shape
    y = jnp.zeros((N, H + 2, W + 2), jnp.float32)
    for kh in range(KH):
        for kw in range(KW):
            contrib = jnp.einsum('nchw,c->nhw', images_nchw, weight_t[:, 0, kh, kw])
            y = y.at[:, kh:kh + H, kw:kw + W].add(contrib)
    y = y[:, 1:1 + H, 1:1 + W] + bias[0]           # crop by padding=1, add bias
    return jnp.transpose(y, (0, 2, 1))[..., None]  # (N, W, H, 1)


if __name__ == "__main__":
    key = jax.random.PRNGKey(0)
    k_x, k_w, k_b = jax.random.split(key, 3)

    N, C, H, W = 2, 4, 16, 16
    images = jax.random.normal(k_x, (N, C, H, W), jnp.float32)
    # ConvTranspose2d(num_channels=C, 1, (3,3)) parameter shapes: (C,1,3,3), (1,)
    weight_t = jax.random.normal(k_w, (C, 1, KH, KW), jnp.float32) * 0.1
    bias = jax.random.normal(k_b, (1,), jnp.float32) * 0.1

    out = jax.block_until_ready(output_projection_layer(images, weight_t, bias))

    ref = _reference(images, weight_t, bias)
    assert out.shape == (N, W, H, 1), out.shape
    assert jnp.allclose(out, ref, atol=1e-4, rtol=1e-4), "mismatch vs reference"

    print("KERNEL_OK")
</pallas_src>

<mosaic_0001>
module attributes {stable_mosaic.version = 11 : i64} {
  func.func @_conv_t_kernel(%arg0: i32, %arg1: memref<1x4x16x16xf32, #tpu.memory_space<vmem>>, %arg2: memref<36xf32, #tpu.memory_space<smem>>, %arg3: memref<1xf32, #tpu.memory_space<smem>>, %arg4: memref<1x16x16xf32, #tpu.memory_space<vmem>>, %arg5: memref<18x128xf32, #tpu.memory_space<vmem>>) attributes {dimension_semantics = [#tpu.dimension_semantics<parallel>], iteration_bounds = array<i64: 2>, scalar_prefetch = 0 : i64, scratch_operands = 1 : i64, tpu.core_type = #tpu.core_type<tc>, window_params = [{transform_indices = @transform_0, window_bounds = array<i64: 1, 4, 16, 16>}, {transform_indices = @transform_1, window_bounds = array<i64: 36>}, {transform_indices = @transform_2, window_bounds = array<i64: 1>}, {transform_indices = @transform_3, window_bounds = array<i64: 1, 16, 16>}]} {
    %cst = arith.constant 0.000000e+00 : f32
    %0 = vector.broadcast %cst : f32 to vector<18x128xf32>
    %c0 = arith.constant 0 : index
    %c0_0 = arith.constant 0 : index
    %1 = vector.load %arg5[%c0, %c0_0] : memref<18x128xf32, #tpu.memory_space<vmem>>, vector<18x128xf32>
    tpu.vector_store %arg5[%c0, %c0_0], %0 {strides = array<i32>} : memref<18x128xf32, #tpu.memory_space<vmem>>, vector<18x128xf32>,
    %c0_1 = arith.constant 0 : index
    %2 = memref.load %arg3[%c0_1] : memref<1xf32, #tpu.memory_space<smem>>
    %c0_i32 = arith.constant 0 : i32
    %cst_2 = arith.constant 0.000000e+00 : f32
    %3 = vector.broadcast %cst_2 : f32 to vector<16x128xf32>
    %4 = arith.index_cast %c0_i32 : i32 to index
    %c0_3 = arith.constant 0 : index
    %c0_4 = arith.constant 0 : index
    %c0_5 = arith.constant 0 : index
    %5 = vector.load %arg1[%4, %c0_3, %c0_4, %c0_5] : memref<1x4x16x16xf32, #tpu.memory_space<vmem>>, vector<1x1x16x16xf32>
    %6 = vector.shape_cast %5 : vector<1x1x16x16xf32> to vector<16x16xf32>
    %c1 = arith.constant 1 : index
    %c0_6 = arith.constant 0 : index
    %7 = vector.load %arg5[%c1, %c0_6] : memref<18x128xf32, #tpu.memory_space<vmem>>, vector<16x16xf32>
    tpu.vector_store %arg5[%c1, %c0_6], %6 {strides = array<i32>} : memref<18x128xf32, #tpu.memory_space<vmem>>, vector<16x16xf32>,
    %c0_7 = arith.constant 0 : index
    %c0_8 = arith.constant 0 : index
    %8 = vector.load %arg5[%c0_7, %c0_8] : memref<18x128xf32, #tpu.memory_space<vmem>>, vector<16x128xf32>
    %c0_9 = arith.constant 0 : index
    %9 = memref.load %arg2[%c0_9] : memref<36xf32, #tpu.memory_space<smem>>
    %10 = vector.broadcast %9 : f32 to vector<16x128xf32>
    %11 = arith.mulf %10, %8 : vector<16x128xf32>
    %12 = arith.addf %3, %11 : vector<16x128xf32>
    %c4 = arith.constant 4 : index
    %13 = memref.load %arg2[%c4] : memref<36xf32, #tpu.memory_space<smem>>
    %14 = vector.broadcast %13 : f32 to vector<16x128xf32>
    %15 = arith.mulf %14, %8 : vector<16x128xf32>
    %16 = arith.addf %3, %15 : vector<16x128xf32>
    %c8 = arith.constant 8 : index
    %17 = memref.load %arg2[%c8] : memref<36xf32, #tpu.memory_space<smem>>
    %18 = vector.broadcast %17 : f32 to vector<16x128xf32>
    %19 = arith.mulf %18, %8 : vector<16x128xf32>
    %20 = arith.addf %3, %19 : vector<16x128xf32>
    %c1_10 = arith.constant 1 : index
    %c0_11 = arith.constant 0 : index
    %21 = vector.load %arg5[%c1_10, %c0_11] : memref<18x128xf32, #tpu.memory_space<vmem>>, vector<16x128xf32>
    %c12 = arith.constant 12 : index
    %22 = memref.load %arg2[%c12] : memref<36xf32, #tpu.memory_space<smem>>
    %23 = vector.broadcast %22 : f32 to vector<16x128xf32>
    %24 = arith.mulf %23, %21 : vector<16x128xf32>
    %25 = arith.addf %12, %24 : vector<16x128xf32>
    %c16 = arith.constant 16 : index
    %26 = memref.load %arg2[%c16] : memref<36xf32, #tpu.memory_space<smem>>
    %27 = vector.broadcast %26 : f32 to vector<16x128xf32>
    %28 = arith.mulf %27, %21 : vector<16x128xf32>
    %29 = arith.addf %16, %28 : vector<16x128xf32>
    %c20 = arith.constant 20 : index
    %30 = memref.load %arg2[%c20] : memref<36xf32, #tpu.memory_space<smem>>
    %31 = vector.broadcast %30 : f32 to vector<16x128xf32>
    %32 = arith.mulf %31, %21 : vector<16x128xf32>
    %33 = arith.addf %20, %32 : vector<16x128xf32>
    %c2 = arith.constant 2 : index
    %c0_12 = arith.constant 0 : index
    %34 = vector.load %arg5[%c2, %c0_12] : memref<18x128xf32, #tpu.memory_space<vmem>>, vector<16x128xf32>
    %c24 = arith.constant 24 : index
    %35 = memref.load %arg2[%c24] : memref<36xf32, #tpu.memory_space<smem>>
    %36 = vector.broadcast %35 : f32 to vector<16x128xf32>
    %37 = arith.mulf %36, %34 : vector<16x128xf32>
    %38 = arith.addf %25, %37 : vector<16x128xf32>
    %c28 = arith.constant 28 : index
    %39 = memref.load %arg2[%c28] : memref<36xf32, #tpu.memory_space<smem>>
    %40 = vector.broadcast %39 : f32 to vector<16x128xf32>
    %41 = arith.mulf %40, %34 : vector<16x128xf32>
    %42 = arith.addf %29, %41 : vector<16x128xf32>
    %c32 = arith.constant 32 : index
    %43 = memref.load %arg2[%c32] : memref<36xf32, #tpu.memory_space<smem>>
    %44 = vector.broadcast %43 : f32 to vector<16x128xf32>
    %45 = arith.mulf %44, %34 : vector<16x128xf32>
    %46 = arith.addf %33, %45 : vector<16x128xf32>
    %47 = arith.index_cast %c0_i32 : i32 to index
    %c1_13 = arith.constant 1 : index
    %c0_14 = arith.constant 0 : index
    %c0_15 = arith.constant 0 : index
    %48 = vector.load %arg1[%47, %c1_13, %c0_14, %c0_15] : memref<1x4x16x16xf32, #tpu.memory_space<vmem>>, vector<1x1x16x16xf32>
    %49 = vector.shape_cast %48 : vector<1x1x16x16xf32> to vector<16x16xf32>
    %c1_16 = arith.constant 1 : index
    %c0_17 = arith.constant 0 : index
    %50 = vector.load %arg5[%c1_16, %c0_17] : memref<18x128xf32, #tpu.memory_space<vmem>>, vector<16x16xf32>
    tpu.vector_store %arg5[%c1_16, %c0_17], %49 {strides = array<i32>} : memref<18x128xf32, #tpu.memory_space<vmem>>, vector<16x16xf32>,
    %c0_18 = arith.constant 0 : index
    %c0_19 = arith.constant 0 : index
    %51 = vector.load %arg5[%c0_18, %c0_19] : memref<18x128xf32, #tpu.memory_space<vmem>>, vector<16x128xf32>
    %c1_20 = arith.constant 1 : index
    %52 = memref.load %arg2[%c1_20] : memref<36xf32, #tpu.memory_space<smem>>
    %53 = vector.broadcast %52 : f32 to vector<16x128xf32>
    %54 = arith.mulf %53, %51 : vector<16x128xf32>
    %55 = arith.addf %38, %54 : vector<16x128xf32>
    %c5 = arith.constant 5 : index
    %56 = memref.load %arg2[%c5] : memref<36xf32, #tpu.memory_space<smem>>
    %57 = vector.broadcast %56 : f32 to vector<16x128xf32>
    %58 = arith.mulf %57, %51 : vector<16x128xf32>
    %59 = arith.addf %42, %58 : vector<16x128xf32>
    %c9 = arith.constant 9 : index
    %60 = memref.load %arg2[%c9] : memref<36xf32, #tpu.memory_space<smem>>
    %61 = vector.broadcast %60 : f32 to vector<16x128xf32>
    %62 = arith.mulf %61, %51 : vector<16x128xf32>
    %63 = arith.addf %46, %62 : vector<16x128xf32>
    %c1_21 = arith.constant 1 : index
    %c0_22 = arith.constant 0 : index
    %64 = vector.load %arg5[%c1_21, %c0_22] : memref<18x128xf32, #tpu.memory_space<vmem>>, vector<16x128xf32>
    %c13 = arith.constant 13 : index
    %65 = memref.load %arg2[%c13] : memref<36xf32, #tpu.memory_space<smem>>
    %66 = vector.broadcast %65 : f32 to vector<16x128xf32>
    %67 = arith.mulf %66, %64 : vector<16x128xf32>
    %68 = arith.addf %55, %67 : vector<16x128xf32>
    %c17 = arith.constant 17 : index
    %69 = memref.load %arg2[%c17] : memref<36xf32, #tpu.memory_space<smem>>
    %70 = vector.broadcast %69 : f32 to vector<16x128xf32>
    %71 = arith.mulf %70, %64 : vector<16x128xf32>
    %72 = arith.addf %59, %71 : vector<16x128xf32>
    %c21 = arith.constant 21 : index
    %73 = memref.load %arg2[%c21] : memref<36xf32, #tpu.memory_space<smem>>
    %74 = vector.broadcast %73 : f32 to vector<16x128xf32>
    %75 = arith.mulf %74, %64 : vector<16x128xf32>
    %76 = arith.addf %63, %75 : vector<16x128xf32>
    %c2_23 = arith.constant 2 : index
    %c0_24 = arith.constant 0 : index
    %77 = vector.load %arg5[%c2_23, %c0_24] : memref<18x128xf32, #tpu.memory_space<vmem>>, vector<16x128xf32>
    %c25 = arith.constant 25 : index
    %78 = memref.load %arg2[%c25] : memref<36xf32, #tpu.memory_space<smem>>
    %79 = vector.broadcast %78 : f32 to vector<16x128xf32>
    %80 = arith.mulf %79, %77 : vector<16x128xf32>
    %81 = arith.addf %68, %80 : vector<16x128xf32>
    %c29 = arith.constant 29 : index
    %82 = memref.load %arg2[%c29] : memref<36xf32, #tpu.memory_space<smem>>
    %83 = vector.broadcast %82 : f32 to vector<16x128xf32>
    %84 = arith.mulf %83, %77 : vector<16x128xf32>
    %85 = arith.addf %72, %84 : vector<16x128xf32>
    %c33 = arith.constant 33 : index
    %86 = memref.load %arg2[%c33] : memref<36xf32, #tpu.memory_space<smem>>
    %87 = vector.broadcast %86 : f32 to vector<16x128xf32>
    %88 = arith.mulf %87, %77 : vector<16x128xf32>
    %89 = arith.addf %76, %88 : vector<16x128xf32>
    %90 = arith.index_cast %c0_i32 : i32 to index
    %c2_25 = arith.constant 2 : index
    %c0_26 = arith.constant 0 : index
    %c0_27 = arith.constant 0 : index
    %91 = vector.load %arg1[%90, %c2_25, %c0_26, %c0_27] : memref<1x4x16x16xf32, #tpu.memory_space<vmem>>, vector<1x1x16x16xf32>
    %92 = vector.shape_cast %91 : vector<1x1x16x16xf32> to vector<16x16xf32>
    %c1_28 = arith.constant 1 : index
    %c0_29 = arith.constant 0 : index
    %93 = vector.load %arg5[%c1_28, %c0_29] : memref<18x128xf32, #tpu.memory_space<vmem>>, vector<16x16xf32>
    tpu.vector_store %arg5[%c1_28, %c0_29], %92 {strides = array<i32>} : memref<18x128xf32, #tpu.memory_space<vmem>>, vector<16x16xf32>,
    %c0_30 = arith.constant 0 : index
    %c0_31 = arith.constant 0 : index
    %94 = vector.load %arg5[%c0_30, %c0_31] : memref<18x128xf32, #tpu.memory_space<vmem>>, vector<16x128xf32>
    %c2_32 = arith.constant 2 : index
    %95 = memref.load %arg2[%c2_32] : memref<36xf32, #tpu.memory_space<smem>>
    %96 = vector.broadcast %95 : f32 to vector<16x128xf32>
    %97 = arith.mulf %96, %94 : vector<16x128xf32>
    %98 = arith.addf %81, %97 : vector<16x128xf32>
    %c6 = arith.constant 6 : index
    %99 = memref.load %arg2[%c6] : memref<36xf32, #tpu.memory_space<smem>>
    %100 = vector.broadcast %99 : f32 to vector<16x128xf32>
    %101 = arith.mulf %100, %94 : vector<16x128xf32>
    %102 = arith.addf %85, %101 : vector<16x128xf32>
    %c10 = arith.constant 10 : index
    %103 = memref.load %arg2[%c10] : memref<36xf32, #tpu.memory_space<smem>>
    %104 = vector.broadcast %103 : f32 to vector<16x128xf32>
    %105 = arith.mulf %104, %94 : vector<16x128xf32>
    %106 = arith.addf %89, %105 : vector<16x128xf32>
    %c1_33 = arith.constant 1 : index
    %c0_34 = arith.constant 0 : index
    %107 = vector.load %arg5[%c1_33, %c0_34] : memref<18x128xf32, #tpu.memory_space<vmem>>, vector<16x128xf32>
    %c14 = arith.constant 14 : index
    %108 = memref.load %arg2[%c14] : memref<36xf32, #tpu.memory_space<smem>>
    %109 = vector.broadcast %108 : f32 to vector<16x128xf32>
    %110 = arith.mulf %109, %107 : vector<16x128xf32>
    %111 = arith.addf %98, %110 : vector<16x128xf32>
    %c18 = arith.constant 18 : index
    %112 = memref.load %arg2[%c18] : memref<36xf32, #tpu.memory_space<smem>>
    %113 = vector.broadcast %112 : f32 to vector<16x128xf32>
    %114 = arith.mulf %113, %107 : vector<16x128xf32>
    %115 = arith.addf %102, %114 : vector<16x128xf32>
    %c22 = arith.constant 22 : index
    %116 = memref.load %arg2[%c22] : memref<36xf32, #tpu.memory_space<smem>>
    %117 = vector.broadcast %116 : f32 to vector<16x128xf32>
    %118 = arith.mulf %117, %107 : vector<16x128xf32>
    %119 = arith.addf %106, %118 : vector<16x128xf32>
    %c2_35 = arith.constant 2 : index
    %c0_36 = arith.constant 0 : index
    %120 = vector.load %arg5[%c2_35, %c0_36] : memref<18x128xf32, #tpu.memory_space<vmem>>, vector<16x128xf32>
    %c26 = arith.constant 26 : index
    %121 = memref.load %arg2[%c26] : memref<36xf32, #tpu.memory_space<smem>>
    %122 = vector.broadcast %121 : f32 to vector<16x128xf32>
    %123 = arith.mulf %122, %120 : vector<16x128xf32>
    %124 = arith.addf %111, %123 : vector<16x128xf32>
    %c30 = arith.constant 30 : index
    %125 = memref.load %arg2[%c30] : memref<36xf32, #tpu.memory_space<smem>>
    %126 = vector.broadcast %125 : f32 to vector<16x128xf32>
    %127 = arith.mulf %126, %120 : vector<16x128xf32>
    %128 = arith.addf %115, %127 : vector<16x128xf32>
    %c34 = arith.constant 34 : index
    %129 = memref.load %arg2[%c34] : memref<36xf32, #tpu.memory_space<smem>>
    %130 = vector.broadcast %129 : f32 to vector<16x128xf32>
    %131 = arith.mulf %130, %120 : vector<16x128xf32>
    %132 = arith.addf %119, %131 : vector<16x128xf32>
    %133 = arith.index_cast %c0_i32 : i32 to index
    %c3 = arith.constant 3 : index
    %c0_37 = arith.constant 0 : index
    %c0_38 = arith.constant 0 : index
    %134 = vector.load %arg1[%133, %c3, %c0_37, %c0_38] : memref<1x4x16x16xf32, #tpu.memory_space<vmem>>, vector<1x1x16x16xf32>
    %135 = vector.shape_cast %134 : vector<1x1x16x16xf32> to vector<16x16xf32>
    %c1_39 = arith.constant 1 : index
    %c0_40 = arith.constant 0 : index
    %136 = vector.load %arg5[%c1_39, %c0_40] : memref<18x128xf32, #tpu.memory_space<vmem>>, vector<16x16xf32>
    tpu.vector_store %arg5[%c1_39, %c0_40], %135 {strides = array<i32>} : memref<18x128xf32, #tpu.memory_space<vmem>>, vector<16x16xf32>,
    %c0_41 = arith.constant 0 : index
    %c0_42 = arith.constant 0 : index
    %137 = vector.load %arg5[%c0_41, %c0_42] : memref<18x128xf32, #tpu.memory_space<vmem>>, vector<16x128xf32>
    %c3_43 = arith.constant 3 : index
    %138 = memref.load %arg2[%c3_43] : memref<36xf32, #tpu.memory_space<smem>>
    %139 = vector.broadcast %138 : f32 to vector<16x128xf32>
    %140 = arith.mulf %139, %137 : vector<16x128xf32>
    %141 = arith.addf %124, %140 : vector<16x128xf32>
    %c7 = arith.constant 7 : index
    %142 = memref.load %arg2[%c7] : memref<36xf32, #tpu.memory_space<smem>>
    %143 = vector.broadcast %142 : f32 to vector<16x128xf32>
    %144 = arith.mulf %143, %137 : vector<16x128xf32>
    %145 = arith.addf %128, %144 : vector<16x128xf32>
    %c11 = arith.constant 11 : index
    %146 = memref.load %arg2[%c11] : memref<36xf32, #tpu.memory_space<smem>>
    %147 = vector.broadcast %146 : f32 to vector<16x128xf32>
    %148 = arith.mulf %147, %137 : vector<16x128xf32>
    %149 = arith.addf %132, %148 : vector<16x128xf32>
    %c1_44 = arith.constant 1 : index
    %c0_45 = arith.constant 0 : index
    %150 = vector.load %arg5[%c1_44, %c0_45] : memref<18x128xf32, #tpu.memory_space<vmem>>, vector<16x128xf32>
    %c15 = arith.constant 15 : index
    %151 = memref.load %arg2[%c15] : memref<36xf32, #tpu.memory_space<smem>>
    %152 = vector.broadcast %151 : f32 to vector<16x128xf32>
    %153 = arith.mulf %152, %150 : vector<16x128xf32>
    %154 = arith.addf %141, %153 : vector<16x128xf32>
    %c19 = arith.constant 19 : index
    %155 = memref.load %arg2[%c19] : memref<36xf32, #tpu.memory_space<smem>>
    %156 = vector.broadcast %155 : f32 to vector<16x128xf32>
    %157 = arith.mulf %156, %150 : vector<16x128xf32>
    %158 = arith.addf %145, %157 : vector<16x128xf32>
    %c23 = arith.constant 23 : index
    %159 = memref.load %arg2[%c23] : memref<36xf32, #tpu.memory_space<smem>>
    %160 = vector.broadcast %159 : f32 to vector<16x128xf32>
    %161 = arith.mulf %160, %150 : vector<16x128xf32>
    %162 = arith.addf %149, %161 : vector<16x128xf32>
    %c2_46 = arith.constant 2 : index
    %c0_47 = arith.constant 0 : index
    %163 = vector.load %arg5[%c2_46, %c0_47] : memref<18x128xf32, #tpu.memory_space<vmem>>, vector<16x128xf32>
    %c27 = arith.constant 27 : index
    %164 = memref.load %arg2[%c27] : memref<36xf32, #tpu.memory_space<smem>>
    %165 = vector.broadcast %164 : f32 to vector<16x128xf32>
    %166 = arith.mulf %165, %163 : vector<16x128xf32>
    %167 = arith.addf %154, %166 : vector<16x128xf32>
    %c31 = arith.constant 31 : index
    %168 = memref.load %arg2[%c31] : memref<36xf32, #tpu.memory_space<smem>>
    %169 = vector.broadcast %168 : f32 to vector<16x128xf32>
    %170 = arith.mulf %169, %163 : vector<16x128xf32>
    %171 = arith.addf %158, %170 : vector<16x128xf32>
    %c35 = arith.constant 35 : index
    %172 = memref.load %arg2[%c35] : memref<36xf32, #tpu.memory_space<smem>>
    %173 = vector.broadcast %172 : f32 to vector<16x128xf32>
    %174 = arith.mulf %173, %163 : vector<16x128xf32>
    %175 = arith.addf %162, %174 : vector<16x128xf32>
    %c1_i32 = arith.constant 1 : i32
    %176 = tpu.dynamic_rotate %167 by %c1_i32 dim 1 : vector<16x128xf32>, i32 -> vector<16x128xf32>
    %177 = arith.addf %176, %171 : vector<16x128xf32>
    %c127_i32 = arith.constant 127 : i32
    %178 = tpu.dynamic_rotate %175 by %c127_i32 dim 1 : vector<16x128xf32>, i32 -> vector<16x128xf32>
    %179 = arith.addf %177, %178 : vector<16x128xf32>
    %180 = tpu.transpose %179, [1, 0] : vector<16x128xf32> -> vector<128x16xf32>
    %181 = vector.extract_strided_slice %180 {offsets = [0, 0], sizes = [16, 16], strides = [1, 1]} : vector<128x16xf32> to vector<16x16xf32>
    %182 = vector.broadcast %2 : f32 to vector<16x16xf32>
    %183 = arith.addf %181, %182 : vector<16x16xf32>
    %184 = arith.index_cast %c0_i32 : i32 to index
    %c0_48 = arith.constant 0 : index
    %c0_49 = arith.constant 0 : index
    %185 = vector.load %arg4[%184, %c0_48, %c0_49] : memref<1x16x16xf32, #tpu.memory_space<vmem>>, vector<1x16x16xf32>
    %186 = vector.shape_cast %185 : vector<1x16x16xf32> to vector<16x16xf32>
    %187 = vector.shape_cast %183 : vector<16x16xf32> to vector<1x16x16xf32>
    tpu.vector_store %arg4[%184, %c0_48, %c0_49], %187 {strides = array<i32>} : memref<1x16x16xf32, #tpu.memory_space<vmem>>, vector<1x16x16xf32>,
    %c1_i32_50 = arith.constant 1 : i32
    return
  }
  func.func @transform_0(%arg0: i32) -> (i32, i32, i32, i32) {
    %c0_i32 = arith.constant 0 : i32
    %c0_i32_0 = arith.constant 0 : i32
    %c0_i32_1 = arith.constant 0 : i32
    %c0_i32_2 = arith.constant 0 : i32
    return %arg0, %c0_i32, %c0_i32_0, %c0_i32_1 : i32, i32, i32, i32
  }
  func.func @transform_1(%arg0: i32) -> i32 {
    %c0_i32 = arith.constant 0 : i32
    %c0_i32_0 = arith.constant 0 : i32
    return %c0_i32 : i32
  }
  func.func @transform_2(%arg0: i32) -> i32 {
    %c0_i32 = arith.constant 0 : i32
    %c0_i32_0 = arith.constant 0 : i32
    return %c0_i32 : i32
  }
  func.func @transform_3(%arg0: i32) -> (i32, i32, i32) {
    %c0_i32 = arith.constant 0 : i32
    %c0_i32_0 = arith.constant 0 : i32
    %c0_i32_1 = arith.constant 0 : i32
    return %arg0, %c0_i32, %c0_i32_0 : i32, i32, i32
  }
}

</mosaic_0001>

<llo_original>
// kernel: tpu_custom_call.1
$region0: #{tpu_custom_call.1}
  #allocation0 [shape = 'u32[]', space=smem, size = 0x4, offset = 0x4, fixed_abs, tag = 'smem constant byte address 0x4 - core index']
  #allocation1 [shape = 'u32[72,128]{1,0:T(1,128)}', space=vmem, size = 0x9000, scoped, tag = 'internal scratch']
  #allocation2 [shape = 'f32[18,128]{1,0:T(8,128)}', space=vmem, size = 0x3000, scoped, tag = 'scratch operand']
  #allocation3 [shape = 'f32[1]{0:T(128)S(6)}', space=smem, size = 0x200, scoped, tag = 'scoped memory for tpu_custom_call.1']
  %s0 = inlined_call_operand.hbm [shape: f32[2,4,16,16], index: 0, kind: input, shape index: {}]
  %s1 = inlined_call_operand.vmem [shape: f32[36], index: 1, kind: input, shape index: {}]
  %s2 = inlined_call_operand.<no memory space> [shape: f32[1], index: 2, kind: input, shape index: {}]
  %s3 = inlined_call_operand.hbm [shape: f32[2,16,16], index: 3, kind: output, shape index: {}]
  %s4 = sld [smem:[#allocation0]]
  $region53: #{tpu_custom_call.1} parent=0
    _
  %s6 = ssub.s32 1, %s4
  %s7 = scalar_select 0, %s6, %s4
  %8 = sst [smem:[#allocation3]] %s2
  $region1: #{tpu_custom_call.1} parent=0
    #allocation4 [shape = 'u8[65536]{0}', space=vmem, size = 0x10000, scoped, tag = 'input window, operand 0']
    #allocation5 [shape = 's32[2]{0}', space=sflag, size = 0x8, scoped, tag = 'scoped memory for tpu_custom_call.1']
    #allocation6 [shape = 's32[2]{0}', space=sflag, size = 0x8, scoped, tag = 'scoped memory for tpu_custom_call.1']
    #allocation7 [shape = 's32[2]{0}', space=sflag, size = 0x8, scoped, tag = 'scoped memory for tpu_custom_call.1']
    #allocation8 [shape = 'u8[512]{0}', space=smem, size = 0x200, scoped, tag = 'input window, operand 1, single buffered']
    #allocation9 [shape = 'u8[16384]{0}', space=vmem, size = 0x4000, scoped, tag = 'output window, operand 0']
    %9 = vsyncpa [#allocation5], 0
    %s10 = scalar_lea.sflag [#allocation5], 1
    %11 = vsyncpa %s10, 0
    %12 = vsyncpa [#allocation7], 0
    %13 = vsyncpa [#allocation6], 0
    %s14 = scalar_lea.sflag [#allocation6], 1
    %15 = vsyncpa %s14, 0
    loop: start=0, step=1, limit=4
    $region2: #{tpu_custom_call.1} parent=1 // loop_pre_header
      _
    $region3: #{tpu_custom_call.1} parent=1 // loop_header
      %s17 = sphi 0, %s21
      %p18 = scmp.ge.s32.totalorder %s17, 4
      %s27 = sphi 0, %s29
      %s30 = sphi 0, %s27
      %s31 = sphi 0, %s30
      %s47 = sphi 0, %s31
      %s51 = sphi 0, %s51
      %s53 = sphi 0, %s51
      %s54 = sphi 0, %s53
      %s68 = sphi 0, %s54
      %s72 = sphi 0, %s72
      %s74 = sphi 0, %s72
      %s75 = sphi 0, %s74
      %s89 = sphi 0, %s75
      %s95 = sphi 0, %s97
      %s98 = sphi 0, %s95
      %s99 = sphi 0, %s98
      %s115 = sphi 0, %s99
    $region4: #{tpu_custom_call.1} parent=1 // loop_header_branch
      %20 = sbr.rel (%p18) target = $region8
    $region5: #{tpu_custom_call.1} parent=1 // loop_body
      %s22 = ssub.s32 %s17, 1
      %s23 = ssub.s32 %s17, 2
      %s24 = sadd.s32 %s17, 1
      %s25 = ssub.s32 %s17, %s24
      %p26 = scmp.eq.s32.totalorder %s25, 0
      %s28 = sadd.s32 %s27, 1
      %s29 = scalar_select %p26, %s27, %s28
      %p32 = pneg %p26
      %p33 = scmp.eq.s32.totalorder %s17, 1
      %p34 = por %p32, %p33
      %p35 = scmp.ne.s32.totalorder %s27, %s30
      %p36 = scmp.eq.s32.totalorder %s17, 0
      %p37 = por %p35, %p36
      %p38 = scmp.ne.s32.totalorder %s27, %s30
      %p39 = scmp.eq.s32.totalorder %s22, 1
      %p40 = por %p38, %p39
      %p41 = scmp.ne.s32.totalorder %s30, %s31
      %p42 = scmp.eq.s32.totalorder %s22, 0
      %p43 = por %p41, %p42
      %p44 = scmp.ne.s32.totalorder %s30, %s31
      %p45 = scmp.eq.s32.totalorder %s23, 1
      %p46 = por %p44, %p45
      %p48 = scmp.ne.s32.totalorder %s31, %s47
      %p49 = scmp.eq.s32.totalorder %s23, 0
      %p50 = por %p48, %p49
      %s52 = sadd.s32 %s51, 1
      %p55 = scmp.eq.s32.totalorder %s17, 1
      %p56 = scmp.ne.s32.totalorder %s51, %s53
      %p57 = scmp.eq.s32.totalorder %s17, 0
      %p58 = por %p56, %p57
      %p59 = scmp.ne.s32.totalorder %s51, %s53
      %p60 = scmp.eq.s32.totalorder %s22, 1
      %p61 = por %p59, %p60
      %p62 = scmp.ne.s32.totalorder %s53, %s54
      %p63 = scmp.eq.s32.totalorder %s22, 0
      %p64 = por %p62, %p63
      %p65 = scmp.ne.s32.totalorder %s53, %s54
      %p66 = scmp.eq.s32.totalorder %s23, 1
      %p67 = por %p65, %p66
      %p69 = scmp.ne.s32.totalorder %s54, %s68
      %p70 = scmp.eq.s32.totalorder %s23, 0
      %p71 = por %p69, %p70
      %s73 = sadd.s32 %s72, 1
      %p76 = scmp.eq.s32.totalorder %s17, 1
      %p77 = scmp.ne.s32.totalorder %s72, %s74
      %p78 = scmp.eq.s32.totalorder %s17, 0
      %p79 = por %p77, %p78
      %p80 = scmp.ne.s32.totalorder %s72, %s74
      %p81 = scmp.eq.s32.totalorder %s22, 1
      %p82 = por %p80, %p81
      %p83 = scmp.ne.s32.totalorder %s74, %s75
      %p84 = scmp.eq.s32.totalorder %s22, 0
      %p85 = por %p83, %p84
      %p86 = scmp.ne.s32.totalorder %s74, %s75
      %p87 = scmp.eq.s32.totalorder %s23, 1
      %p88 = por %p86, %p87
      %p90 = scmp.ne.s32.totalorder %s75, %s89
      %p91 = scmp.eq.s32.totalorder %s23, 0
      %p92 = por %p90, %p91
      %s93 = ssub.s32 %s17, %s24
      %p94 = scmp.eq.s32.totalorder %s93, 0
      %s96 = sadd.s32 %s95, 1
      %s97 = scalar_select %p94, %s95, %s96
      %p100 = pneg %p94
      %p101 = scmp.eq.s32.totalorder %s17, 1
      %p102 = por %p100, %p101
      %p103 = scmp.ne.s32.totalorder %s95, %s98
      %p104 = scmp.eq.s32.totalorder %s17, 0
      %p105 = por %p103, %p104
      %p106 = scmp.ne.s32.totalorder %s95, %s98
      %p107 = scmp.eq.s32.totalorder %s22, 1
      %p108 = por %p106, %p107
      %p109 = scmp.ne.s32.totalorder %s98, %s99
      %p110 = scmp.eq.s32.totalorder %s22, 0
      %p111 = por %p109, %p110
      %p112 = scmp.ne.s32.totalorder %s98, %s99
      %p113 = scmp.eq.s32.totalorder %s23, 1
      %p114 = por %p112, %p113
      %p116 = scmp.ne.s32.totalorder %s99, %s115
      %p117 = scmp.eq.s32.totalorder %s23, 0
      %p118 = por %p116, %p117
      %p119 = scmp.le.s32.totalorder 1, %s17
      %p120 = scmp.lt.s32.totalorder %s17, 3
      %p121 = pnand %p119, %p120
      %p122 = pneg %p121
      // Predicated region
      $region9: #{tpu_custom_call.1} parent=5 // pred_check
        _
      $region10: #{tpu_custom_call.1} parent=5 // pred_check_branch
        %124 = sbr.rel (%p121) target = $region12
      $region11: #{tpu_custom_call.1} parent=5 // pred_region
        %s125 = ssub.s32 %s17, 1
        // Predicated region
        $region13: #{tpu_custom_call.1} parent=11 // pred_check
          %p126 = pneg %p64
        $region14: #{tpu_custom_call.1} parent=11 // pred_check_branch
          %128 = sbr.rel (%p126) target = $region16
        $region15: #{tpu_custom_call.1} parent=11 // pred_region
          %130 = vsyncadd [#allocation7], 0
          %s132 = sshll.u32 %s1, 4
          %s133 = int_to_ptr.vmem [resolvable:$true] %s132
          %135 = dma.vmem_to_smem %s133, 16, [#allocation8], [#allocation7]
        $region16: #{tpu_custom_call.1} parent=11 // pred_fallthru
          _
        // Predicated region
        $region17: #{tpu_custom_call.1} parent=11 // pred_check
          %p136 = pneg %p85
        $region18: #{tpu_custom_call.1} parent=11 // pred_check_branch
          %138 = sbr.rel (%p136) target = $region20
        $region19: #{tpu_custom_call.1} parent=11 // pred_region
          _
        $region20: #{tpu_custom_call.1} parent=11 // pred_fallthru
          _
      $region12: #{tpu_custom_call.1} parent=5 // pred_fallthru
        _
      %p139 = scmp.lt.s32.totalorder %s17, 2
      // Predicated region
      $region21: #{tpu_custom_call.1} parent=5 // pred_check
        %p140 = pneg %p139
      $region22: #{tpu_custom_call.1} parent=5 // pred_check_branch
        %142 = sbr.rel (%p140) target = $region24
      $region23: #{tpu_custom_call.1} parent=5 // pred_region
        // Predicated region
        $region25: #{tpu_custom_call.1} parent=23 // pred_check
          %p143 = pneg %p37
        $region26: #{tpu_custom_call.1} parent=23 // pred_check_branch
          %145 = sbr.rel (%p143) target = $region28
        $region27: #{tpu_custom_call.1} parent=23 // pred_region
          %s146 = sand.u32 %s27, 1
          %s147 = scalar_lea.sflag [#allocation5], %s146
          %s148 = sand.u32 %s27, 1
          %s149 = smul.addr %s148, 64
          %s150 = scalar_lea.vmem [#allocation4], %s149
          %152 = vsyncadd %s147, 0
          %s153 = smul.addr %s17, 8
          %s154 = smul.addr %s153, 8
          %s155 = scalar_lea.hbm %s0, %s154
          %s156 = sshll.u32 %s155, 4
          %s157 = int_to_ptr.hbm [resolvable:$true] %s156
          %s158 = sshll.u32 %s150, 4
          %s159 = int_to_ptr.vmem [resolvable:$true] %s158
          %164 = dma.hbm_to_vmem [thread:$0]  %s157, 1024, %s159, %s147, 128, 128, 8
        $region28: #{tpu_custom_call.1} parent=23 // pred_fallthru
          _
      $region24: #{tpu_custom_call.1} parent=5 // pred_fallthru
        _
      %p165 = scmp.le.s32.totalorder 1, %s17
      %p166 = scmp.lt.s32.totalorder %s17, 3
      %p167 = pnand %p165, %p166
      %p168 = pneg %p167
      // Predicated region
      $region29: #{tpu_custom_call.1} parent=5 // pred_check
        _
      $region30: #{tpu_custom_call.1} parent=5 // pred_check_branch
        %170 = sbr.rel (%p167) target = $region32
      $region31: #{tpu_custom_call.1} parent=5 // pred_region
        %s171 = ssub.s32 %s17, 1
        %s172 = sand.u32 %s30, 1
        %s173 = scalar_lea.sflag [#allocation5], %s172
        %s174 = sand.u32 %s30, 1
        %s175 = smul.addr %s174, 64
        %s176 = scalar_lea.vmem [#allocation4], %s175
        // Predicated region
        $region33: #{tpu_custom_call.1} parent=31 // pred_check
          %p177 = pneg %p43
        $region34: #{tpu_custom_call.1} parent=31 // pred_check_branch
          %179 = sbr.rel (%p177) target = $region36
        $region35: #{tpu_custom_call.1} parent=31 // pred_region
          %181 = dma.done %s173, 1024
        $region36: #{tpu_custom_call.1} parent=31 // pred_fallthru
          _
        // Predicated region
        $region37: #{tpu_custom_call.1} parent=31 // pred_check
          %p182 = pneg %p64
        $region38: #{tpu_custom_call.1} parent=31 // pred_check_branch
          %184 = sbr.rel (%p182) target = $region40
        $region39: #{tpu_custom_call.1} parent=31 // pred_region
          %186 = dma.done [#allocation7], 16
        $region40: #{tpu_custom_call.1} parent=31 // pred_fallthru
          _
        %187 = sfence
        %s188 = sand.u32 %s30, 1
        %s189 = scalar_lea.sflag [#allocation5], %s188
        %s190 = sand.u32 %s30, 1
        %s191 = smul.addr %s190, 64
        %s192 = scalar_lea.vmem [#allocation4], %s191
        %p193 = pneg %p43
        %p194 = pneg %p40
        %p195 = pneg %p64
        %p196 = pneg %p61
        %p197 = pneg %p85
        %p198 = pneg %p82
        %p199 = pneg %p111
        %p200 = pneg %p108
        %s201 = sand.u32 %s98, 1
        %s202 = scalar_lea.sflag [#allocation6], %s201
        %s203 = sand.u32 %s98, 1
        %s204 = smul.addr %s203, 16
        %s205 = scalar_lea.vmem [#allocation9], %s204
        %206 = vst [vmem:[#allocation2] sm:$0xff] 0.0
        %207 = vst [vmem:[#allocation2 + $0x8] sm:$0xff] 0.0
        %208 = vst [vmem:[#allocation2 + $0x10] sm:$0x3] 0.0
        %s209 = sld [smem:[#allocation3]]
        %v210 = vld [vmem:[%s176] sm:$0xff]
        %v211 = vld [vmem:[%s176 + $0x8] sm:$0xff]
        %vm212 = vcmask 130048
        %213 = vst.msk [vmem:[#allocation2 + $0x1] sm:$0xff] %vm212, %v210
        %214 = vst.msk [vmem:[#allocation2 + $0x9] sm:$0xff] %vm212, %v211
        %v215 = vld [vmem:[#allocation2] sm:$0xff]
        %v216 = vld [vmem:[#allocation2 + $0x8] sm:$0xff]
        %s217 = sld [smem:[#allocation8]]
        %v218 = vstv %s217
        %v219 = vmul.f32 %v218, %v215
        %v220 = vmul.f32 %v218, %v216
        %v221 = vadd.f32 %v219, 0.0
        %v222 = vadd.f32 %v220, 0.0
        %s223 = sld [smem:[#allocation8 + $0x4]]
        %v224 = vstv %s223
        %v225 = vmul.f32 %v224, %v215
        %v226 = vmul.f32 %v224, %v216
        %v227 = vadd.f32 %v225, 0.0
        %v228 = vadd.f32 %v226, 0.0
        %s229 = sld [smem:[#allocation8 + $0x8]]
        %v230 = vstv %s229
        %v231 = vmul.f32 %v230, %v215
        %v232 = vmul.f32 %v230, %v216
        %v233 = vadd.f32 %v231, 0.0
        %v234 = vadd.f32 %v232, 0.0
        %v235 = vld [vmem:[#allocation2 + $0x1] sm:$0xff]
        %v236 = vld [vmem:[#allocation2 + $0x9] sm:$0xff]
        %s237 = sld [smem:[#allocation8 + $0xc]]
        %v238 = vstv %s237
        %v239 = vmul.f32 %v238, %v235
        %v240 = vmul.f32 %v238, %v236
        %v241 = vadd.f32 %v221, %v239
        %v242 = vadd.f32 %v222, %v240
        %s243 = sld [smem:[#allocation8 + $0x10]]
        %v244 = vstv %s243
        %v245 = vmul.f32 %v244, %v235
        %v246 = vmul.f32 %v244, %v236
        %v247 = vadd.f32 %v227, %v245
        %v248 = vadd.f32 %v228, %v246
        %s249 = sld [smem:[#allocation8 + $0x14]]
        %v250 = vstv %s249
        %v251 = vmul.f32 %v250, %v235
        %v252 = vmul.f32 %v250, %v236
        %v253 = vadd.f32 %v233, %v251
        %v254 = vadd.f32 %v234, %v252
        %v255 = vld [vmem:[#allocation2 + $0x2] sm:$0xff]
        %v256 = vld [vmem:[#allocation2 + $0xa] sm:$0xff]
        %s257 = sld [smem:[#allocation8 + $0x18]]
        %v258 = vstv %s257
        %v259 = vmul.f32 %v258, %v255
        %v260 = vmul.f32 %v258, %v256
        %v261 = vadd.f32 %v241, %v259
        %v262 = vadd.f32 %v242, %v260
        %s263 = sld [smem:[#allocation8 + $0x1c]]
        %v264 = vstv %s263
        %v265 = vmul.f32 %v264, %v255
        %v266 = vmul.f32 %v264, %v256
        %v267 = vadd.f32 %v247, %v265
        %v268 = vadd.f32 %v248, %v266
        %s269 = sld [smem:[#allocation8 + $0x20]]
        %v270 = vstv %s269
        %v271 = vmul.f32 %v270, %v255
        %v272 = vmul.f32 %v270, %v256
        %v273 = vadd.f32 %v253, %v271
        %v274 = vadd.f32 %v254, %v272
        %s275 = scalar_lea.vmem %s176, 16 [#allocation4]
        %v276 = vld [vmem:[%s275] sm:$0xff]
        %v277 = vld [vmem:[%s275 + $0x8] sm:$0xff]
        %278 = vst.msk [vmem:[#allocation2 + $0x1] sm:$0xff] %vm212, %v276
        %279 = vst.msk [vmem:[#allocation2 + $0x9] sm:$0xff] %vm212, %v277
        %v280 = vld [vmem:[#allocation2] sm:$0xff]
        %v281 = vld [vmem:[#allocation2 + $0x8] sm:$0xff]
        %s282 = sld [smem:[#allocation8 + $0x1]]
        %v283 = vstv %s282
        %v284 = vmul.f32 %v283, %v280
        %v285 = vmul.f32 %v283, %v281
        %v286 = vadd.f32 %v261, %v284
        %v287 = vadd.f32 %v262, %v285
        %s288 = sld [smem:[#allocation8 + $0x5]]
        %v289 = vstv %s288
        %v290 = vmul.f32 %v289, %v280
        %v291 = vmul.f32 %v289, %v281
        %v292 = vadd.f32 %v267, %v290
        %v293 = vadd.f32 %v268, %v291
        %s294 = sld [smem:[#allocation8 + $0x9]]
        %v295 = vstv %s294
        %v296 = vmul.f32 %v295, %v280
        %v297 = vmul.f32 %v295, %v281
        %v298 = vadd.f32 %v273, %v296
        %v299 = vadd.f32 %v274, %v297
        %v300 = vld [vmem:[#allocation2 + $0x1] sm:$0xff]
        %v301 = vld [vmem:[#allocation2 + $0x9] sm:$0xff]
        %s302 = sld [smem:[#allocation8 + $0xd]]
        %v303 = vstv %s302
        %v304 = vmul.f32 %v303, %v300
        %v305 = vmul.f32 %v303, %v301
        %v306 = vadd.f32 %v286, %v304
        %v307 = vadd.f32 %v287, %v305
        %s308 = sld [smem:[#allocation8 + $0x11]]
        %v309 = vstv %s308
        %v310 = vmul.f32 %v309, %v300
        %v311 = vmul.f32 %v309, %v301
        %v312 = vadd.f32 %v292, %v310
        %v313 = vadd.f32 %v293, %v311
        %s314 = sld [smem:[#allocation8 + $0x15]]
        %v315 = vstv %s314
        %v316 = vmul.f32 %v315, %v300
        %v317 = vmul.f32 %v315, %v301
        %v318 = vadd.f32 %v298, %v316
        %v319 = vadd.f32 %v299, %v317
        %v320 = vld [vmem:[#allocation2 + $0x2] sm:$0xff]
        %v321 = vld [vmem:[#allocation2 + $0xa] sm:$0xff]
        %s322 = sld [smem:[#allocation8 + $0x19]]
        %v323 = vstv %s322
        %v324 = vmul.f32 %v323, %v320
        %v325 = vmul.f32 %v323, %v321
        %v326 = vadd.f32 %v306, %v324
        %v327 = vadd.f32 %v307, %v325
        %s328 = sld [smem:[#allocation8 + $0x1d]]
        %v329 = vstv %s328
        %v330 = vmul.f32 %v329, %v320
        %v331 = vmul.f32 %v329, %v321
        %v332 = vadd.f32 %v312, %v330
        %v333 = vadd.f32 %v313, %v331
        %s334 = sld [smem:[#allocation8 + $0x21]]
        %v335 = vstv %s334
        %v336 = vmul.f32 %v335, %v320
        %v337 = vmul.f32 %v335, %v321
        %v338 = vadd.f32 %v318, %v336
        %v339 = vadd.f32 %v319, %v337
        %s340 = scalar_lea.vmem %s176, 32 [#allocation4]
        %v341 = vld [vmem:[%s340] sm:$0xff]
        %v342 = vld [vmem:[%s340 + $0x8] sm:$0xff]
        %343 = vst.msk [vmem:[#allocation2 + $0x1] sm:$0xff] %vm212, %v341
        %344 = vst.msk [vmem:[#allocation2 + $0x9] sm:$0xff] %vm212, %v342
        %v345 = vld [vmem:[#allocation2] sm:$0xff]
        %v346 = vld [vmem:[#allocation2 + $0x8] sm:$0xff]
        %s347 = sld [smem:[#allocation8 + $0x2]]
        %v348 = vstv %s347
        %v349 = vmul.f32 %v348, %v345
        %v350 = vmul.f32 %v348, %v346
        %v351 = vadd.f32 %v326, %v349
        %v352 = vadd.f32 %v327, %v350
        %s353 = sld [smem:[#allocation8 + $0x6]]
        %v354 = vstv %s353
        %v355 = vmul.f32 %v354, %v345
        %v356 = vmul.f32 %v354, %v346
        %v357 = vadd.f32 %v332, %v355
        %v358 = vadd.f32 %v333, %v356
        %s359 = sld [smem:[#allocation8 + $0xa]]
        %v360 = vstv %s359
        %v361 = vmul.f32 %v360, %v345
        %v362 = vmul.f32 %v360, %v346
        %v363 = vadd.f32 %v338, %v361
        %v364 = vadd.f32 %v339, %v362
        %v365 = vld [vmem:[#allocation2 + $0x1] sm:$0xff]
        %v366 = vld [vmem:[#allocation2 + $0x9] sm:$0xff]
        %s367 = sld [smem:[#allocation8 + $0xe]]
        %v368 = vstv %s367
        %v369 = vmul.f32 %v368, %v365
        %v370 = vmul.f32 %v368, %v366
        %v371 = vadd.f32 %v351, %v369
        %v372 = vadd.f32 %v352, %v370
        %s373 = sld [smem:[#allocation8 + $0x12]]
        %v374 = vstv %s373
        %v375 = vmul.f32 %v374, %v365
        %v376 = vmul.f32 %v374, %v366
        %v377 = vadd.f32 %v357, %v375
        %v378 = vadd.f32 %v358, %v376
        %s379 = sld [smem:[#allocation8 + $0x16]]
        %v380 = vstv %s379
        %v381 = vmul.f32 %v380, %v365
        %v382 = vmul.f32 %v380, %v366
        %v383 = vadd.f32 %v363, %v381
        %v384 = vadd.f32 %v364, %v382
        %v385 = vld [vmem:[#allocation2 + $0x2] sm:$0xff]
        %v386 = vld [vmem:[#allocation2 + $0xa] sm:$0xff]
        %s387 = sld [smem:[#allocation8 + $0x1a]]
        %v388 = vstv %s387
        %v389 = vmul.f32 %v388, %v385
        %v390 = vmul.f32 %v388, %v386
        %v391 = vadd.f32 %v371, %v389
        %v392 = vadd.f32 %v372, %v390
        %s393 = sld [smem:[#allocation8 + $0x1e]]
        %v394 = vstv %s393
        %v395 = vmul.f32 %v394, %v385
        %v396 = vmul.f32 %v394, %v386
        %v397 = vadd.f32 %v377, %v395
        %v398 = vadd.f32 %v378, %v396
        %s399 = sld [smem:[#allocation8 + $0x22]]
        %v400 = vstv %s399
        %v401 = vmul.f32 %v400, %v385
        %v402 = vmul.f32 %v400, %v386
        %v403 = vadd.f32 %v383, %v401
        %v404 = vadd.f32 %v384, %v402
        %s405 = scalar_lea.vmem %s176, 48 [#allocation4]
        %v406 = vld [vmem:[%s405] sm:$0xff]
        %v407 = vld [vmem:[%s405 + $0x8] sm:$0xff]
        %408 = vst.msk [vmem:[#allocation2 + $0x1] sm:$0xff] %vm212, %v406
        %409 = vst.msk [vmem:[#allocation2 + $0x9] sm:$0xff] %vm212, %v407
        %v410 = vld [vmem:[#allocation2] sm:$0xff]
        %v411 = vld [vmem:[#allocation2 + $0x8] sm:$0xff]
        %s412 = sld [smem:[#allocation8 + $0x3]]
        %v413 = vstv %s412
        %v414 = vmul.f32 %v413, %v410
        %v415 = vmul.f32 %v413, %v411
        %v416 = vadd.f32 %v391, %v414
        %v417 = vadd.f32 %v392, %v415
        %s418 = sld [smem:[#allocation8 + $0x7]]
        %v419 = vstv %s418
        %v420 = vmul.f32 %v419, %v410
        %v421 = vmul.f32 %v419, %v411
        %v422 = vadd.f32 %v397, %v420
        %v423 = vadd.f32 %v398, %v421
        %s424 = sld [smem:[#allocation8 + $0xb]]
        %v425 = vstv %s424
        %v426 = vmul.f32 %v425, %v410
        %v427 = vmul.f32 %v425, %v411
        %v428 = vadd.f32 %v403, %v426
        %v429 = vadd.f32 %v404, %v427
        %v430 = vld [vmem:[#allocation2 + $0x1] sm:$0xff]
        %v431 = vld [vmem:[#allocation2 + $0x9] sm:$0xff]
        %s432 = sld [smem:[#allocation8 + $0xf]]
        %v433 = vstv %s432
        %v434 = vmul.f32 %v433, %v430
        %v435 = vmul.f32 %v433, %v431
        %v436 = vadd.f32 %v416, %v434
        %v437 = vadd.f32 %v417, %v435
        %s438 = sld [smem:[#allocation8 + $0x13]]
        %v439 = vstv %s438
        %v440 = vmul.f32 %v439, %v430
        %v441 = vmul.f32 %v439, %v431
        %v442 = vadd.f32 %v422, %v440
        %v443 = vadd.f32 %v423, %v441
        %s444 = sld [smem:[#allocation8 + $0x17]]
        %v445 = vstv %s444
        %v446 = vmul.f32 %v445, %v430
        %v447 = vmul.f32 %v445, %v431
        %v448 = vadd.f32 %v428, %v446
        %v449 = vadd.f32 %v429, %v447
        %v450 = vld [vmem:[#allocation2 + $0x2] sm:$0xff]
        %v451 = vld [vmem:[#allocation2 + $0xa] sm:$0xff]
        %s452 = sld [smem:[#allocation8 + $0x1b]]
        %v453 = vstv %s452
        %v454 = vmul.f32 %v453, %v450
        %v455 = vmul.f32 %v453, %v451
        %v456 = vadd.f32 %v436, %v454
        %v457 = vadd.f32 %v437, %v455
        %s458 = sld [smem:[#allocation8 + $0x1f]]
        %v459 = vstv %s458
        %v460 = vmul.f32 %v459, %v450
        %v461 = vmul.f32 %v459, %v451
        %v462 = vadd.f32 %v442, %v460
        %v463 = vadd.f32 %v443, %v461
        %s464 = sld [smem:[#allocation8 + $0x23]]
        %v465 = vstv %s464
        %v466 = vmul.f32 %v465, %v450
        %v467 = vmul.f32 %v465, %v451
        %v468 = vadd.f32 %v448, %v466
        %v469 = vadd.f32 %v449, %v467
        %470 = vrot.lane.b32.xlu0 %v456, 1
        %v471 = vpop.permute.xlu0 %470
        %472 = vrot.lane.b32.xlu0 %v457, 1
        %v473 = vpop.permute.xlu0 %472
        %v474 = vadd.f32 %v471, %v462
        %v475 = vadd.f32 %v473, %v463
        %476 = vrot.lane.b32.xlu0 %v468, 127
        %v477 = vpop.permute.xlu0 %476
        %478 = vrot.lane.b32.xlu0 %v469, 127
        %v479 = vpop.permute.xlu0 %478
        %v480 = vadd.f32 %v474, %v477
        %v481 = vadd.f32 %v475, %v479
        %482 = vxpose.xlu0.b32.start [1/16] %v480, 128
        %483 = vxpose.xlu0.b32.cont [2/16] %v481, 128
        %484 = vxpose.xlu0.b32.cont [3/16] 0.0, 128
        %485 = vxpose.xlu0.b32.cont [4/16] 0.0, 128
        %486 = vxpose.xlu0.b32.cont [5/16] 0.0, 128
        %487 = vxpose.xlu0.b32.cont [6/16] 0.0, 128
        %488 = vxpose.xlu0.b32.cont [7/16] 0.0, 128
        %489 = vxpose.xlu0.b32.cont [8/16] 0.0, 128
        %490 = vxpose.xlu0.b32.cont [9/16] 0.0, 128
        %491 = vxpose.xlu0.b32.cont [10/16] 0.0, 128
        %492 = vxpose.xlu0.b32.cont [11/16] 0.0, 128
        %493 = vxpose.xlu0.b32.cont [12/16] 0.0, 128
        %494 = vxpose.xlu0.b32.cont [13/16] 0.0, 128
        %495 = vxpose.xlu0.b32.cont [14/16] 0.0, 128
        %496 = vxpose.xlu0.b32.cont [15/16] 0.0, 128
        %497 = vxpose.xlu0.b32.end [16/16] 0.0, 128
        %v498 = vpop.trf.xlu0
        %v499 = vpop.trf.xlu0
        %v500 = vpop.trf.xlu0
        %v501 = vpop.trf.xlu0
        %v502 = vpop.trf.xlu0
        %v503 = vpop.trf.xlu0
        %v504 = vpop.trf.xlu0
        %v505 = vpop.trf.xlu0
        %v506 = vpop.trf.xlu0
        %v507 = vpop.trf.xlu0
        %v508 = vpop.trf.xlu0
        %v509 = vpop.trf.xlu0
        %v510 = vpop.trf.xlu0
        %v511 = vpop.trf.xlu0
        %v512 = vpop.trf.xlu0
        %v513 = vpop.trf.xlu0
        %v514 = vstv %s209
        %v515 = vadd.f32 %v498, %v514
        %v516 = vadd.f32 %v499, %v514
        %517 = vst.msk [vmem:[%s205] sm:$0xff] %vm212, %v515
        %518 = vst.msk [vmem:[%s205 + $0x8] sm:$0xff] %vm212, %v516
        %s519 = sand.u32 %s98, 1
        %s520 = scalar_lea.sflag [#allocation6], %s519
        %s521 = sand.u32 %s98, 1
        %s522 = smul.addr %s521, 16
        %s523 = scalar_lea.vmem [#allocation9], %s522
        // Predicated region
        $region41: #{tpu_custom_call.1} parent=31 // pred_check
          %p524 = pneg %p108
        $region42: #{tpu_custom_call.1} parent=31 // pred_check_branch
          %526 = sbr.rel (%p524) target = $region44
        $region43: #{tpu_custom_call.1} parent=31 // pred_region
          %528 = vsyncadd %s520, 0
          %s529 = smul.addr %s22, 2
          %s530 = smul.addr %s529, 8
          %s531 = scalar_lea.hbm %s3, %s530
          %s532 = sshll.u32 %s523, 4
          %s533 = int_to_ptr.vmem [resolvable:$true] %s532
          %s534 = sshll.u32 %s531, 4
          %s535 = int_to_ptr.hbm [resolvable:$true] %s534
          %540 = dma.vmem_to_hbm [thread:$0]  %s533, 256, %s535, %s520, 128, 128, 8
        $region44: #{tpu_custom_call.1} parent=31 // pred_fallthru
          _
      $region32: #{tpu_custom_call.1} parent=5 // pred_fallthru
        _
      %p541 = scmp.le.s32.totalorder 2, %s17
      // Predicated region
      $region45: #{tpu_custom_call.1} parent=5 // pred_check
        %p542 = pneg %p541
      $region46: #{tpu_custom_call.1} parent=5 // pred_check_branch
        %544 = sbr.rel (%p542) target = $region48
      $region47: #{tpu_custom_call.1} parent=5 // pred_region
        %s545 = ssub.s32 %s17, 2
        // Predicated region
        $region49: #{tpu_custom_call.1} parent=47 // pred_check
          %p546 = pneg %p114
        $region50: #{tpu_custom_call.1} parent=47 // pred_check_branch
          %548 = sbr.rel (%p546) target = $region52
        $region51: #{tpu_custom_call.1} parent=47 // pred_region
          %s549 = sand.u32 %s99, 1
          %s550 = scalar_lea.sflag [#allocation6], %s549
          %s551 = sand.u32 %s99, 1
          %s552 = smul.addr %s551, 16
          %s553 = scalar_lea.vmem [#allocation9], %s552
          %555 = dma.done %s550, 256
        $region52: #{tpu_custom_call.1} parent=47 // pred_fallthru
          _
      $region48: #{tpu_custom_call.1} parent=5 // pred_fallthru
        _
    $region6: #{tpu_custom_call.1} parent=1 // loop_footer
      %s21 = sadd.s32 1, %s17
    $region7: #{tpu_custom_call.1} parent=1 // loop_footer_branch
      %16 = sbr.rel target = $region3
    $region8: #{tpu_custom_call.1} parent=1 // loop_exit
      _
    %556 = vsyncpa [#allocation5], 1
    %s557 = scalar_lea.sflag [#allocation5], 1
    %558 = vsyncpa %s557, 1
    %559 = vsyncpa [#allocation6], 1
    %s560 = scalar_lea.sflag [#allocation6], 1
    %561 = vsyncpa %s560, 1
    %562 = vsyncpa [#allocation7], 1
    %s563 = scalar_lea.sflag [#allocation7], 1
    %564 = vsyncpa %s563, 1

</llo_original>
